<compile_context>
chip_gen: v6e
topology: v6e:2x2x1
jax: 0.10.0
libtpu: 0.0.40
codegen_flags: <defaults>
</compile_context>

<pallas_src>
from collections import namedtuple

import numpy as np
import jax
import jax.numpy as jnp
from jax.experimental import pallas as pl
from jax.experimental.pallas import tpu as pltpu

HIDDEN = 128      # affine1 output width
N_ACTIONS = 3     # action_head output width
HEAD_W = 128      # fused lane-dense head width: [3 logits | 1 value | 124 pad]
MAX_TILE = 1024   # max batch-tile rows (multiple of 16; ~1 MiB/tile at D=128)
ROW_ALIGN = 16    # tile row alignment (covers f32 (8,128) and bf16 (16,128))

# Constant mask rows (built once on host, tiny resident VMEM inputs).
_LOGIT_MASK = np.zeros((1, HEAD_W), np.float32)
_LOGIT_MASK[0, N_ACTIONS:] = -1e30          # kill value lane + padding in softmax
_VALUE_MASK = np.zeros((1, HEAD_W), np.float32)
_VALUE_MASK[0, N_ACTIONS] = 1.0             # keep only the critic lane

PreparedParams = namedtuple("PreparedParams", "w1 b1 wh bh lmask vmask")


def policy_kernel(x_ref, w1_ref, b1_ref, wh_ref, bh_ref, lmask_ref, vmask_ref,
                  out_ref):
    # hidden layer: (TB, D) @ (D, 128) + (1, 128), ReLU  (f32 accumulation)
    h = jnp.dot(x_ref[...], w1_ref[...], preferred_element_type=jnp.float32)
    h = jnp.maximum(h + b1_ref[...], 0.0)

    # fused actor+critic heads: (TB, 128) @ (128, 128) + (1, 128)
    head = jnp.dot(h.astype(wh_ref.dtype), wh_ref[...],
                   preferred_element_type=jnp.float32)
    head = head + bh_ref[...]

    # softmax over the first N_ACTIONS lanes only: additive -1e30 mask row,
    # exp() underflows masked lanes to exactly 0, exact divide for the norm.
    masked = head + lmask_ref[...]
    m = jnp.max(masked, axis=-1, keepdims=True)
    e = jnp.exp(masked - m)
    denom = jnp.sum(e, axis=-1, keepdims=True)
    probs = e / denom

    # lane N_ACTIONS carries the critic value; all other lanes of value_col = 0
    value_col = head * vmask_ref[...]

    # single lane-dense output block: [probs(3) | value(1) | zeros(124)]
    out_ref[...] = (probs + value_col).astype(out_ref.dtype)


def _fuse_heads(w2, b2, w3, b3):
    """Concatenate actor/critic heads into one lane-dense (128,128)/(1,128)."""
    wh = np.zeros((HIDDEN, HEAD_W), np.float32)
    wh[:, :N_ACTIONS] = np.asarray(w2, np.float32)
    wh[:, N_ACTIONS] = np.asarray(w3, np.float32).reshape(HIDDEN)
    bh = np.zeros((1, HEAD_W), np.float32)
    bh[0, :N_ACTIONS] = np.asarray(b2, np.float32).reshape(N_ACTIONS)
    bh[0, N_ACTIONS] = float(np.asarray(b3, np.float32).reshape(()))
    return wh, bh


def prepare_params(params, compute_dtype):
    """One-time weight fusion + casts (do NOT rebuild per forward call)."""
    w1, b1, w2, b2, w3, b3 = params
    wh, bh = _fuse_heads(w2, b2, w3, b3)
    return PreparedParams(
        w1=jnp.asarray(w1, compute_dtype),                       # (D, 128)
        b1=jnp.asarray(b1, jnp.float32).reshape(1, HIDDEN),       # f32 bias
        wh=jnp.asarray(wh, compute_dtype),                        # (128, 128)
        bh=jnp.asarray(bh, jnp.float32),                          # (1, 128)
        lmask=jnp.asarray(_LOGIT_MASK),
        vmask=jnp.asarray(_VALUE_MASK),
    )


def _round_up(n, m):
    return ((n + m - 1) // m) * m


def _choose_tile(batch):
    return min(MAX_TILE, _round_up(max(batch, 1), ROW_ALIGN))


def make_policy_forward_batch(params, *, compute_dtype=jnp.bfloat16,
                              out_dtype=None):
    """Returns a jitted fn xs:(B, *obs_shape) -> (action_prob (B,3), values (B,1)).

    Weight fusion / casting happens once here; padding, the pallas_call and the
    output slicing all run under one jit so no extra HBM passes are added.
    """
    prep = prepare_params(params, compute_dtype)
    if out_dtype is None:
        out_dtype = jnp.float32 if compute_dtype == jnp.float32 else jnp.bfloat16

    @jax.jit
    def fwd(xs):
        B = xs.shape[0]
        x = xs.reshape(B, -1).astype(compute_dtype)
        d = x.shape[1]

        tb = _choose_tile(B)                 # static (shape-derived) tile size
        b_pad = _round_up(B, tb)
        if b_pad != B:
            x = jnp.pad(x, ((0, b_pad - B), (0, 0)))

        out = pl.pallas_call(
            policy_kernel,
            out_shape=jax.ShapeDtypeStruct((b_pad, HEAD_W), out_dtype),
            grid=(b_pad // tb,),
            in_specs=[
                pl.BlockSpec((tb, d), lambda i: (i, 0)),            # x tile
                pl.BlockSpec((d, HIDDEN), lambda i: (0, 0)),        # w1 (resident)
                pl.BlockSpec((1, HIDDEN), lambda i: (0, 0)),        # b1
                pl.BlockSpec((HIDDEN, HEAD_W), lambda i: (0, 0)),   # fused head W
                pl.BlockSpec((1, HEAD_W), lambda i: (0, 0)),        # fused head b
                pl.BlockSpec((1, HEAD_W), lambda i: (0, 0)),        # logit mask row
                pl.BlockSpec((1, HEAD_W), lambda i: (0, 0)),        # value mask row
            ],
            out_specs=pl.BlockSpec((tb, HEAD_W), lambda i: (i, 0)),
            compiler_params=pltpu.CompilerParams(
                dimension_semantics=("parallel",),
                vmem_limit_bytes=32 * 1024 * 1024),
        )(x, prep.w1, prep.b1, prep.wh, prep.bh, prep.lmask, prep.vmask)

        probs = out[:B, :N_ACTIONS]
        values = out[:B, N_ACTIONS:N_ACTIONS + 1]
        return probs, values

    return fwd


def policy_forward_batch(xs, params, *, compute_dtype=jnp.bfloat16):
    """Convenience one-shot batched forward (builds the jitted fn internally)."""
    return make_policy_forward_batch(params, compute_dtype=compute_dtype)(xs)


def policy_forward(x, params, *, compute_dtype=jnp.float32):
    """Single-observation forward, identical semantics to the PyTorch module.
    For RL rollouts, prefer make_policy_forward_batch over many environments —
    a padded B=1 tile is launch-overhead dominated."""
    fwd = make_policy_forward_batch(params, compute_dtype=compute_dtype)
    probs, values = fwd(x.reshape(1, -1))
    return probs.reshape(N_ACTIONS), values.reshape(1)


def init_params(key, obs_dim):
    """Deterministic synthetic parameters matching the module's layer shapes."""
    k1, k2, k3 = jax.random.split(key, 3)
    w1 = jax.random.normal(k1, (obs_dim, HIDDEN), jnp.float32) * 0.1
    b1 = jnp.zeros((HIDDEN,), jnp.float32)
    w2 = jax.random.normal(k2, (HIDDEN, N_ACTIONS), jnp.float32) * 0.1
    b2 = jnp.zeros((N_ACTIONS,), jnp.float32)
    w3 = jax.random.normal(k3, (HIDDEN, 1), jnp.float32) * 0.1
    b3 = jnp.zeros((1,), jnp.float32)
    return (w1, b1, w2, b2, w3, b3)


def policy_reference(x, params):
    """Pure-JAX reference mirroring the PyTorch forward."""
    w1, b1, w2, b2, w3, b3 = params
    xf = x.reshape(-1)
    h = jnp.maximum(xf @ w1 + b1, 0.0)
    probs = jax.nn.softmax(h @ w2 + b2, axis=-1)
    value = h @ w3 + b3
    return probs, value


if __name__ == "__main__":
    key = jax.random.PRNGKey(0)
    k_obs, k_par = jax.random.split(key)

    # Small synthetic observation (8 vehicles x 16 features -> flattened D=128),
    # consistent with the module flattening its whole observation.
    obs_shape = (8, 16)
    obs_dim = obs_shape[0] * obs_shape[1]
    params = init_params(k_par, obs_dim)

    B = 16
    xs = jax.random.normal(k_obs, (B,) + obs_shape, jnp.float32)

    # Exact path: f32 matmul operands / f32 output.
    fwd_f32 = make_policy_forward_batch(params, compute_dtype=jnp.float32)
    probs_f, vals_f = fwd_f32(xs)

    # Default path: bf16 matmul operands + bf16 lane-dense output
    # (full-rate MXU, halved input/output DMA on v6e/v7x/v5e).
    fwd_bf16 = make_policy_forward_batch(params)
    probs_b, vals_b = fwd_bf16(xs)

    # Module-style single-observation forward.
    probs_1, val_1 = policy_forward(xs[0], params)

    jax.block_until_ready((probs_f, vals_f, probs_b, vals_b, probs_1, val_1))

    # Correctness vs. pure-JAX reference.
    ref_p, ref_v = jax.vmap(lambda x: policy_reference(x, params))(xs)
    ref_v = np.asarray(ref_v).reshape(B, 1)

    assert probs_f.shape == (B, N_ACTIONS) and vals_f.shape == (B, 1)
    assert probs_b.shape == (B, N_ACTIONS) and vals_b.shape == (B, 1)
    assert probs_1.shape == (N_ACTIONS,) and val_1.shape == (1,)

    # f32 path: tight tolerances (exact divide -> probabilities sum to 1).
    assert np.allclose(np.asarray(probs_f), np.asarray(ref_p), atol=2e-3)
    assert np.allclose(np.asarray(vals_f), ref_v, atol=2e-3)
    assert np.allclose(np.asarray(jnp.sum(probs_f, axis=-1)), 1.0, atol=1e-3)
    assert np.allclose(np.asarray(probs_1), np.asarray(ref_p[0]), atol=2e-3)
    assert np.allclose(np.asarray(val_1), ref_v[0], atol=2e-3)

    # bf16 path: looser tolerances (bf16 operands + bf16 output).
    probs_b32 = np.asarray(probs_b, np.float32)
    vals_b32 = np.asarray(vals_b, np.float32)
    assert np.allclose(probs_b32, np.asarray(ref_p), atol=5e-2)
    assert np.allclose(vals_b32, ref_v, atol=5e-2)
    assert np.allclose(probs_b32.sum(axis=-1), 1.0, atol=5e-2)

    print("KERNEL_OK")
</pallas_src>

<mosaic_0001>
module attributes {stable_mosaic.version = 11 : i64} {
  func.func @policy_kernel(%arg0: i32, %arg1: memref<16x128xf32, #tpu.memory_space<vmem>>, %arg2: memref<128x128xf32, #tpu.memory_space<vmem>>, %arg3: memref<1x128xf32, #tpu.memory_space<vmem>>, %arg4: memref<128x128xf32, #tpu.memory_space<vmem>>, %arg5: memref<1x128xf32, #tpu.memory_space<vmem>>, %arg6: memref<1x128xf32, #tpu.memory_space<vmem>>, %arg7: memref<1x128xf32, #tpu.memory_space<vmem>>, %arg8: memref<16x128xf32, #tpu.memory_space<vmem>>) attributes {dimension_semantics = [#tpu.dimension_semantics<parallel>], iteration_bounds = array<i64: 1>, scalar_prefetch = 0 : i64, scratch_operands = 0 : i64, tpu.core_type = #tpu.core_type<tc>, window_params = [{transform_indices = @transform_0, window_bounds = array<i64: 16, 128>}, {pipeline_mode = #tpu.pipeline_mode<synchronous>, transform_indices = @transform_1, window_bounds = array<i64: 128, 128>}, {pipeline_mode = #tpu.pipeline_mode<synchronous>, transform_indices = @transform_2, window_bounds = array<i64: 1, 128>}, {pipeline_mode = #tpu.pipeline_mode<synchronous>, transform_indices = @transform_3, window_bounds = array<i64: 128, 128>}, {pipeline_mode = #tpu.pipeline_mode<synchronous>, transform_indices = @transform_4, window_bounds = array<i64: 1, 128>}, {pipeline_mode = #tpu.pipeline_mode<synchronous>, transform_indices = @transform_5, window_bounds = array<i64: 1, 128>}, {pipeline_mode = #tpu.pipeline_mode<synchronous>, transform_indices = @transform_6, window_bounds = array<i64: 1, 128>}, {transform_indices = @transform_7, window_bounds = array<i64: 16, 128>}]} {
    %c0 = arith.constant 0 : index
    %c0_0 = arith.constant 0 : index
    %0 = vector.load %arg1[%c0, %c0_0] : memref<16x128xf32, #tpu.memory_space<vmem>>, vector<16x128xf32>
    %c0_1 = arith.constant 0 : index
    %c0_2 = arith.constant 0 : index
    %1 = vector.load %arg2[%c0_1, %c0_2] : memref<128x128xf32, #tpu.memory_space<vmem>>, vector<128x128xf32>
    %cst = arith.constant dense<0.000000e+00> : vector<16x128xf32>
    %2 = tpu.matmul %0, %1, %cst {dimension_numbers = #tpu.dot_dimension_numbers<[1], [0], [0], [1], [0, 0, 1, 1], [], []>} : vector<16x128xf32>, vector<128x128xf32>, vector<16x128xf32> -> vector<16x128xf32>
    %c0_3 = arith.constant 0 : index
    %c0_4 = arith.constant 0 : index
    %3 = vector.load %arg3[%c0_3, %c0_4] : memref<1x128xf32, #tpu.memory_space<vmem>>, vector<1x128xf32>
    %4 = vector.broadcast %3 : vector<1x128xf32> to vector<16x128xf32>
    %5 = arith.addf %2, %4 : vector<16x128xf32>
    %cst_5 = arith.constant 0.000000e+00 : f32
    %6 = vector.broadcast %cst_5 : f32 to vector<16x128xf32>
    %7 = arith.maximumf %5, %6 : vector<16x128xf32>
    %c0_6 = arith.constant 0 : index
    %c0_7 = arith.constant 0 : index
    %8 = vector.load %arg4[%c0_6, %c0_7] : memref<128x128xf32, #tpu.memory_space<vmem>>, vector<128x128xf32>
    %cst_8 = arith.constant dense<0.000000e+00> : vector<16x128xf32>
    %9 = tpu.matmul %7, %8, %cst_8 {dimension_numbers = #tpu.dot_dimension_numbers<[1], [0], [0], [1], [0, 0, 1, 1], [], []>} : vector<16x128xf32>, vector<128x128xf32>, vector<16x128xf32> -> vector<16x128xf32>
    %c0_9 = arith.constant 0 : index
    %c0_10 = arith.constant 0 : index
    %10 = vector.load %arg5[%c0_9, %c0_10] : memref<1x128xf32, #tpu.memory_space<vmem>>, vector<1x128xf32>
    %11 = vector.broadcast %10 : vector<1x128xf32> to vector<16x128xf32>
    %12 = arith.addf %9, %11 : vector<16x128xf32>
    %c0_11 = arith.constant 0 : index
    %c0_12 = arith.constant 0 : index
    %13 = vector.load %arg6[%c0_11, %c0_12] : memref<1x128xf32, #tpu.memory_space<vmem>>, vector<1x128xf32>
    %14 = vector.broadcast %13 : vector<1x128xf32> to vector<16x128xf32>
    %15 = arith.addf %12, %14 : vector<16x128xf32>
    %cst_13 = arith.constant dense<0xFF800000> : vector<16xf32>
    %16 = vector.multi_reduction <maximumf>, %15, %cst_13 [1] : vector<16x128xf32> to vector<16xf32>
    %17 = vector.shape_cast %16 : vector<16xf32> to vector<16x1xf32>
    %18 = vector.broadcast %17 : vector<16x1xf32> to vector<16x128xf32>
    %19 = arith.subf %15, %18 : vector<16x128xf32>
    %20 = math.exp %19 : vector<16x128xf32>
    %cst_14 = arith.constant dense<0.000000e+00> : vector<16xf32>
    %21 = vector.multi_reduction <add>, %20, %cst_14 [1] : vector<16x128xf32> to vector<16xf32>
    %22 = vector.shape_cast %21 : vector<16xf32> to vector<16x1xf32>
    %23 = vector.broadcast %22 : vector<16x1xf32> to vector<16x128xf32>
    %24 = arith.divf %20, %23 : vector<16x128xf32>
    %c0_15 = arith.constant 0 : index
    %c0_16 = arith.constant 0 : index
    %25 = vector.load %arg7[%c0_15, %c0_16] : memref<1x128xf32, #tpu.memory_space<vmem>>, vector<1x128xf32>
    %26 = vector.broadcast %25 : vector<1x128xf32> to vector<16x128xf32>
    %27 = arith.mulf %12, %26 : vector<16x128xf32>
    %28 = arith.addf %24, %27 : vector<16x128xf32>
    %c0_17 = arith.constant 0 : index
    %c0_18 = arith.constant 0 : index
    %29 = vector.load %arg8[%c0_17, %c0_18] : memref<16x128xf32, #tpu.memory_space<vmem>>, vector<16x128xf32>
    tpu.vector_store %arg8[%c0_17, %c0_18], %28 {strides = array<i32>} : memref<16x128xf32, #tpu.memory_space<vmem>>, vector<16x128xf32>,
    return
  }
  func.func @transform_0(%arg0: i32) -> (i32, i32) {
    %c0_i32 = arith.constant 0 : i32
    %c0_i32_0 = arith.constant 0 : i32
    return %arg0, %c0_i32 : i32, i32
  }
  func.func @transform_1(%arg0: i32) -> (i32, i32) {
    %c0_i32 = arith.constant 0 : i32
    %c0_i32_0 = arith.constant 0 : i32
    %c0_i32_1 = arith.constant 0 : i32
    return %c0_i32, %c0_i32_0 : i32, i32
  }
  func.func @transform_2(%arg0: i32) -> (i32, i32) {
    %c0_i32 = arith.constant 0 : i32
    %c0_i32_0 = arith.constant 0 : i32
    %c0_i32_1 = arith.constant 0 : i32
    return %c0_i32, %c0_i32_0 : i32, i32
  }
  func.func @transform_3(%arg0: i32) -> (i32, i32) {
    %c0_i32 = arith.constant 0 : i32
    %c0_i32_0 = arith.constant 0 : i32
    %c0_i32_1 = arith.constant 0 : i32
    return %c0_i32, %c0_i32_0 : i32, i32
  }
  func.func @transform_4(%arg0: i32) -> (i32, i32) {
    %c0_i32 = arith.constant 0 : i32
    %c0_i32_0 = arith.constant 0 : i32
    %c0_i32_1 = arith.constant 0 : i32
    return %c0_i32, %c0_i32_0 : i32, i32
  }
  func.func @transform_5(%arg0: i32) -> (i32, i32) {
    %c0_i32 = arith.constant 0 : i32
    %c0_i32_0 = arith.constant 0 : i32
    %c0_i32_1 = arith.constant 0 : i32
    return %c0_i32, %c0_i32_0 : i32, i32
  }
  func.func @transform_6(%arg0: i32) -> (i32, i32) {
    %c0_i32 = arith.constant 0 : i32
    %c0_i32_0 = arith.constant 0 : i32
    %c0_i32_1 = arith.constant 0 : i32
    return %c0_i32, %c0_i32_0 : i32, i32
  }
  func.func @transform_7(%arg0: i32) -> (i32, i32) {
    %c0_i32 = arith.constant 0 : i32
    %c0_i32_0 = arith.constant 0 : i32
    return %arg0, %c0_i32 : i32, i32
  }
}

</mosaic_0001>

<llo_original>
// kernel: fwd.1
$region0: #{fwd.1}
  #allocation0 [shape = 'u32[]', space=smem, size = 0x4, offset = 0x4, fixed_abs, tag = 'smem constant byte address 0x4 - core index']
  #allocation1 [shape = 'u32[144,128]{1,0:T(1,128)}', space=vmem, size = 0x12000, scoped, tag = 'internal scratch']
  %s0 = inlined_call_operand.vmem [shape: f32[16,128], index: 0, kind: input, shape index: {}]
  %s1 = inlined_call_operand.vmem [shape: f32[128,128], index: 1, kind: input, shape index: {}]
  %s2 = inlined_call_operand.vmem [shape: f32[1,128], index: 2, kind: input, shape index: {}, may-alias: {2,4}]
  %s3 = inlined_call_operand.hbm [shape: f32[128,128], index: 3, kind: input, shape index: {}]
  %s4 = inlined_call_operand.vmem [shape: f32[1,128], index: 4, kind: input, shape index: {}, may-alias: {2,4}]
  %s5 = inlined_call_operand.vmem [shape: f32[1,128], index: 5, kind: input, shape index: {}]
  %s6 = inlined_call_operand.vmem [shape: f32[1,128], index: 6, kind: input, shape index: {}]
  %s7 = inlined_call_operand.vmem [shape: f32[16,128], index: 7, kind: output, shape index: {}]
  %s8 = sld [smem:[#allocation0]]
  $region42: #{fwd.1} parent=0
    _
  %s10 = ssub.s32 1, %s8
  %s11 = scalar_select 0, %s10, %s8
  $region1: #{fwd.1} parent=0
    #allocation2 [shape = 'u8[65536]{0}', space=vmem, size = 0x10000, scoped, tag = 'input window, operand 3, single buffered']
    #allocation3 [shape = 's32[1]{0}', space=sflag, size = 0x4, scoped, tag = 'scoped memory for fwd.1']
    %12 = vsyncpa [#allocation3], 0
    // Predicated region
    $region2: #{fwd.1} parent=1 // pred_check
      _
    $region3: #{fwd.1} parent=1 // pred_check_branch
      %14 = sbr.rel (0) target = $region5
    $region4: #{fwd.1} parent=1 // pred_region
      _
    $region5: #{fwd.1} parent=1 // pred_fallthru
      _
    // Predicated region
    $region6: #{fwd.1} parent=1 // pred_check
      _
    $region7: #{fwd.1} parent=1 // pred_check_branch
      %16 = sbr.rel (0) target = $region9
    $region8: #{fwd.1} parent=1 // pred_region
      _
    $region9: #{fwd.1} parent=1 // pred_fallthru
      _
    // Predicated region
    $region10: #{fwd.1} parent=1 // pred_check
      _
    $region11: #{fwd.1} parent=1 // pred_check_branch
      %18 = sbr.rel (0) target = $region13
    $region12: #{fwd.1} parent=1 // pred_region
      _
    $region13: #{fwd.1} parent=1 // pred_fallthru
      _
    // Predicated region
    $region14: #{fwd.1} parent=1 // pred_check
      _
    $region15: #{fwd.1} parent=1 // pred_check_branch
      %20 = sbr.rel (0) target = $region17
    $region16: #{fwd.1} parent=1 // pred_region
      %s22 = ssub.s32 2048, 2048
      %23 = vsyncadd [#allocation3], %s22
      %s24 = sshll.u32 [#allocation2], 4
      %s25 = int_to_ptr.vmem [resolvable:$true] %s24
      %30 = dma.hbm_to_vmem [thread:$0]  %s3, 2048, %s25, [#allocation3], 128, 128, 8
    $region17: #{fwd.1} parent=1 // pred_fallthru
      _
    // Predicated region
    $region18: #{fwd.1} parent=1 // pred_check
      _
    $region19: #{fwd.1} parent=1 // pred_check_branch
      %32 = sbr.rel (0) target = $region21
    $region20: #{fwd.1} parent=1 // pred_region
      _
    $region21: #{fwd.1} parent=1 // pred_fallthru
      _
    // Predicated region
    $region22: #{fwd.1} parent=1 // pred_check
      _
    $region23: #{fwd.1} parent=1 // pred_check_branch
      %34 = sbr.rel (0) target = $region25
    $region24: #{fwd.1} parent=1 // pred_region
      _
    $region25: #{fwd.1} parent=1 // pred_fallthru
      _
    // Predicated region
    $region26: #{fwd.1} parent=1 // pred_check
      _
    $region27: #{fwd.1} parent=1 // pred_check_branch
      %36 = sbr.rel (0) target = $region29
    $region28: #{fwd.1} parent=1 // pred_region
      _
    $region29: #{fwd.1} parent=1 // pred_fallthru
      _
    // Predicated region
    $region30: #{fwd.1} parent=1 // pred_check
      _
    $region31: #{fwd.1} parent=1 // pred_check_branch
      %38 = sbr.rel (0) target = $region33
    $region32: #{fwd.1} parent=1 // pred_region
      %39 = dma.done [#allocation3], 2048
    $region33: #{fwd.1} parent=1 // pred_fallthru
      _
    %v40 = vld [vmem:[%s0] sm:$0xff]
    %v41 = vld [vmem:[%s0 + $0x8] sm:$0xff]
    %v42 = vld [vmem:[%s1] sm:$0xff]
    %v43 = vld [vmem:[%s1 + $0x8] sm:$0xff]
    %v44 = vld [vmem:[%s1 + $0x10] sm:$0xff]
    %v45 = vld [vmem:[%s1 + $0x18] sm:$0xff]
    %v46 = vld [vmem:[%s1 + $0x20] sm:$0xff]
    %v47 = vld [vmem:[%s1 + $0x28] sm:$0xff]
    %v48 = vld [vmem:[%s1 + $0x30] sm:$0xff]
    %v49 = vld [vmem:[%s1 + $0x38] sm:$0xff]
    %v50 = vld [vmem:[%s1 + $0x40] sm:$0xff]
    %v51 = vld [vmem:[%s1 + $0x48] sm:$0xff]
    %v52 = vld [vmem:[%s1 + $0x50] sm:$0xff]
    %v53 = vld [vmem:[%s1 + $0x58] sm:$0xff]
    %v54 = vld [vmem:[%s1 + $0x60] sm:$0xff]
    %v55 = vld [vmem:[%s1 + $0x68] sm:$0xff]
    %v56 = vld [vmem:[%s1 + $0x70] sm:$0xff]
    %v57 = vld [vmem:[%s1 + $0x78] sm:$0xff]
    %v58 = vld [vmem:[%s2] sm:$0x1]
    %v60 = vlaneseq
    %v61 = vshrl.u32 %v60, 7
    %v62 = vsub.s32 0, %v61
    %v63 = vrot.slane %v58, %v62
    %65 = vmatprep.subr.mxu0 0.0
    %66 = vmatpush1.msra.mxu0 %v57
    %67 = vmatprep.subr.mxu0 0.0
    %68 = vmatpush1.msra.mxu0 %v56
    %69 = vmatprep.subr.mxu0 0.0
    %70 = vmatpush1.msra.mxu0 %v55
    %71 = vmatprep.subr.mxu0 0.0
    %72 = vmatpush1.msra.mxu0 %v54
    %73 = vmatprep.subr.mxu0 0.0
    %74 = vmatpush1.msra.mxu0 %v53
    %75 = vmatprep.subr.mxu0 0.0
    %76 = vmatpush1.msra.mxu0 %v52
    %77 = vmatprep.subr.mxu0 0.0
    %78 = vmatpush1.msra.mxu0 %v51
    %79 = vmatprep.subr.mxu0 0.0
    %80 = vmatpush1.msra.mxu0 %v50
    %81 = vmatprep.subr.mxu0 0.0
    %82 = vmatpush1.msra.mxu0 %v49
    %83 = vmatprep.subr.mxu0 0.0
    %84 = vmatpush1.msra.mxu0 %v48
    %85 = vmatprep.subr.mxu0 0.0
    %86 = vmatpush1.msra.mxu0 %v47
    %87 = vmatprep.subr.mxu0 0.0
    %88 = vmatpush1.msra.mxu0 %v46
    %89 = vmatprep.subr.mxu0 0.0
    %90 = vmatpush1.msra.mxu0 %v45
    %91 = vmatprep.subr.mxu0 0.0
    %92 = vmatpush1.msra.mxu0 %v44
    %93 = vmatprep.subr.mxu0 0.0
    %94 = vmatpush1.msra.mxu0 %v43
    %95 = vmatprep.subr.mxu0 0.0
    %96 = vmatpush1.msra.mxu0 %v42
    %97 = vmatprep.subr.mxu0 0.0
    %98 = vmatpush2.msra.mxu0 0.0
    %99 = vmatprep.subr.mxu0 0.0
    %100 = vmatpush2.msra.mxu0 0.0
    %101 = vmatprep.subr.mxu0 0.0
    %102 = vmatpush2.msra.mxu0 0.0
    %103 = vmatprep.subr.mxu0 0.0
    %104 = vmatpush2.msra.mxu0 0.0
    %105 = vmatprep.subr.mxu0 0.0
    %106 = vmatpush2.msra.mxu0 0.0
    %107 = vmatprep.subr.mxu0 0.0
    %108 = vmatpush2.msra.mxu0 0.0
    %109 = vmatprep.subr.mxu0 0.0
    %110 = vmatpush2.msra.mxu0 0.0
    %111 = vmatprep.subr.mxu0 0.0
    %112 = vmatpush2.msra.mxu0 0.0
    %113 = vmatprep.subr.mxu0 0.0
    %114 = vmatpush2.msra.mxu0 0.0
    %115 = vmatprep.subr.mxu0 0.0
    %116 = vmatpush2.msra.mxu0 0.0
    %117 = vmatprep.subr.mxu0 0.0
    %118 = vmatpush2.msra.mxu0 0.0
    %119 = vmatprep.subr.mxu0 0.0
    %120 = vmatpush2.msra.mxu0 0.0
    %121 = vmatprep.subr.mxu0 0.0
    %122 = vmatpush2.msra.mxu0 0.0
    %123 = vmatprep.subr.mxu0 0.0
    %124 = vmatpush2.msra.mxu0 0.0
    %125 = vmatprep.subr.mxu0 0.0
    %126 = vmatpush2.msra.mxu0 0.0
    %127 = vmatprep.subr.mxu0 0.0
    %128 = vmatpush2.msra.mxu0 0.0
    %129 = vmatprep.mubr.f32.mxu0 0.0
    %130 = vmatmul.mubr.f32.gmra.mxu0 %v40
    %v131 = vpop.f32.mrf.mxu0
    %v132 = vadd.f32 %v63, %v131
    %v133 = vpop.f32.mrf.mxu0
    %134 = vmatprep.mubr.f32.mxu0 0.0
    %135 = vmatmul.mubr.f32.gmra.mxu0 %v41
    %v136 = vpop.f32.mrf.mxu0
    %v137 = vadd.f32 %v63, %v136
    %v138 = vpop.f32.mrf.mxu0
    %139 = vdwg.mxu0
    %v140 = vmax.f32 %v132, 0.0
    %v141 = vmax.f32 %v137, 0.0
    %v142 = vld [vmem:[#allocation2] sm:$0xff]
    %v143 = vld [vmem:[#allocation2 + $0x8] sm:$0xff]
    %v144 = vld [vmem:[#allocation2 + $0x10] sm:$0xff]
    %v145 = vld [vmem:[#allocation2 + $0x18] sm:$0xff]
    %v146 = vld [vmem:[#allocation2 + $0x20] sm:$0xff]
    %v147 = vld [vmem:[#allocation2 + $0x28] sm:$0xff]
    %v148 = vld [vmem:[#allocation2 + $0x30] sm:$0xff]
    %v149 = vld [vmem:[#allocation2 + $0x38] sm:$0xff]
    %v150 = vld [vmem:[#allocation2 + $0x40] sm:$0xff]
    %v151 = vld [vmem:[#allocation2 + $0x48] sm:$0xff]
    %v152 = vld [vmem:[#allocation2 + $0x50] sm:$0xff]
    %v153 = vld [vmem:[#allocation2 + $0x58] sm:$0xff]
    %v154 = vld [vmem:[#allocation2 + $0x60] sm:$0xff]
    %v155 = vld [vmem:[#allocation2 + $0x68] sm:$0xff]
    %v156 = vld [vmem:[#allocation2 + $0x70] sm:$0xff]
    %v157 = vld [vmem:[#allocation2 + $0x78] sm:$0xff]
    %v158 = vld [vmem:[%s4] sm:$0x1]
    %v160 = vlaneseq
    %v161 = vshrl.u32 %v160, 7
    %v162 = vsub.s32 0, %v161
    %v163 = vrot.slane %v158, %v162
    %165 = vmatprep.subr.mxu0 0.0
    %166 = vmatpush1.msra.mxu0 %v157
    %167 = vmatprep.subr.mxu0 0.0
    %168 = vmatpush1.msra.mxu0 %v156
    %169 = vmatprep.subr.mxu0 0.0
    %170 = vmatpush1.msra.mxu0 %v155
    %171 = vmatprep.subr.mxu0 0.0
    %172 = vmatpush1.msra.mxu0 %v154
    %173 = vmatprep.subr.mxu0 0.0
    %174 = vmatpush1.msra.mxu0 %v153
    %175 = vmatprep.subr.mxu0 0.0
    %176 = vmatpush1.msra.mxu0 %v152
    %177 = vmatprep.subr.mxu0 0.0
    %178 = vmatpush1.msra.mxu0 %v151
    %179 = vmatprep.subr.mxu0 0.0
    %180 = vmatpush1.msra.mxu0 %v150
    %181 = vmatprep.subr.mxu0 0.0
    %182 = vmatpush1.msra.mxu0 %v149
    %183 = vmatprep.subr.mxu0 0.0
    %184 = vmatpush1.msra.mxu0 %v148
    %185 = vmatprep.subr.mxu0 0.0
    %186 = vmatpush1.msra.mxu0 %v147
    %187 = vmatprep.subr.mxu0 0.0
    %188 = vmatpush1.msra.mxu0 %v146
    %189 = vmatprep.subr.mxu0 0.0
    %190 = vmatpush1.msra.mxu0 %v145
    %191 = vmatprep.subr.mxu0 0.0
    %192 = vmatpush1.msra.mxu0 %v144
    %193 = vmatprep.subr.mxu0 0.0
    %194 = vmatpush1.msra.mxu0 %v143
    %195 = vmatprep.subr.mxu0 0.0
    %196 = vmatpush1.msra.mxu0 %v142
    %197 = vmatprep.subr.mxu0 0.0
    %198 = vmatpush2.msra.mxu0 0.0
    %199 = vmatprep.subr.mxu0 0.0
    %200 = vmatpush2.msra.mxu0 0.0
    %201 = vmatprep.subr.mxu0 0.0
    %202 = vmatpush2.msra.mxu0 0.0
    %203 = vmatprep.subr.mxu0 0.0
    %204 = vmatpush2.msra.mxu0 0.0
    %205 = vmatprep.subr.mxu0 0.0
    %206 = vmatpush2.msra.mxu0 0.0
    %207 = vmatprep.subr.mxu0 0.0
    %208 = vmatpush2.msra.mxu0 0.0
    %209 = vmatprep.subr.mxu0 0.0
    %210 = vmatpush2.msra.mxu0 0.0
    %211 = vmatprep.subr.mxu0 0.0
    %212 = vmatpush2.msra.mxu0 0.0
    %213 = vmatprep.subr.mxu0 0.0
    %214 = vmatpush2.msra.mxu0 0.0
    %215 = vmatprep.subr.mxu0 0.0
    %216 = vmatpush2.msra.mxu0 0.0
    %217 = vmatprep.subr.mxu0 0.0
    %218 = vmatpush2.msra.mxu0 0.0
    %219 = vmatprep.subr.mxu0 0.0
    %220 = vmatpush2.msra.mxu0 0.0
    %221 = vmatprep.subr.mxu0 0.0
    %222 = vmatpush2.msra.mxu0 0.0
    %223 = vmatprep.subr.mxu0 0.0
    %224 = vmatpush2.msra.mxu0 0.0
    %225 = vmatprep.subr.mxu0 0.0
    %226 = vmatpush2.msra.mxu0 0.0
    %227 = vmatprep.subr.mxu0 0.0
    %228 = vmatpush2.msra.mxu0 0.0
    %229 = vmatprep.mubr.f32.mxu0 0.0
    %230 = vmatmul.mubr.f32.gmra.mxu0 %v140
    %v231 = vpop.f32.mrf.mxu0
    %v232 = vadd.f32 %v163, %v231
    %v233 = vpop.f32.mrf.mxu0
    %234 = vmatprep.mubr.f32.mxu0 0.0
    %235 = vmatmul.mubr.f32.gmra.mxu0 %v141
    %v236 = vpop.f32.mrf.mxu0
    %v237 = vadd.f32 %v163, %v236
    %v238 = vpop.f32.mrf.mxu0
    %239 = vdwg.mxu0
    %v240 = vld [vmem:[%s5] sm:$0x1]
    %v242 = vlaneseq
    %v243 = vshrl.u32 %v242, 7
    %v244 = vsub.s32 0, %v243
    %v245 = vrot.slane %v240, %v244
    %v247 = vadd.f32 %v232, %v245
    %v248 = vadd.f32 %v237, %v245
    %249 = vmax.xlane.f32.xlu0 %v247
    %v250 = vpop.xlane.xlu0 %249
    %251 = vmax.xlane.f32.xlu0 %v248
    %v252 = vpop.xlane.xlu0 %251
    %v253 = vsub.f32 %v247, %v250
    %v254 = vsub.f32 %v248, %v252
    %v255 = vmul.f32 %v253, 1.442695
    %v256 = vpow.pop %v255
    %v257 = vmul.f32 %v254, 1.442695
    %v258 = vpow.pop %v257
    %259 = vadd.xlane.f32.xlu0 %v256
    %v260 = vpop.xlane.xlu0 %259
    %261 = vadd.xlane.f32.xlu0 %v258
    %v262 = vpop.xlane.xlu0 %261
    %v263 = vrcp.pop %v260
    %v264 = vmul.f32 %v256, %v263
    %v265 = vrcp.pop %v262
    %v266 = vmul.f32 %v258, %v265
    %v267 = vld [vmem:[%s6] sm:$0x1]
    %v269 = vlaneseq
    %v270 = vshrl.u32 %v269, 7
    %v271 = vsub.s32 0, %v270
    %v272 = vrot.slane %v267, %v271
    %v274 = vmul.f32 %v232, %v272
    %v275 = vmul.f32 %v237, %v272
    %v276 = vadd.f32 %v264, %v274
    %v277 = vadd.f32 %v266, %v275
    %278 = vst [vmem:[%s7] sm:$0xff] %v276
    %279 = vst [vmem:[%s7 + $0x8] sm:$0xff] %v277
    // Predicated region
    $region34: #{fwd.1} parent=1 // pred_check
      _
    $region35: #{fwd.1} parent=1 // pred_check_branch
      %281 = sbr.rel (0) target = $region37
    $region36: #{fwd.1} parent=1 // pred_region
      _
    $region37: #{fwd.1} parent=1 // pred_fallthru
      _
    // Predicated region
    $region38: #{fwd.1} parent=1 // pred_check
      _
    $region39: #{fwd.1} parent=1 // pred_check_branch
      %283 = sbr.rel (0) target = $region41
    $region40: #{fwd.1} parent=1 // pred_region
      _
    $region41: #{fwd.1} parent=1 // pred_fallthru
      _
    %284 = vsyncpa [#allocation3], 1

</llo_original>
